<compile_context>
chip_gen: v6e
topology: v6e:2x2x1
jax: 0.10.0
libtpu: 0.0.40
codegen_flags: <defaults>
</compile_context>

<pallas_src>
import functools

import jax
import jax.numpy as jnp
from jax.experimental import pallas as pl
from jax.experimental.pallas import tpu as pltpu


def _detection_kernel(x_ref, add_ref, o_ref, *, stride, anchors, bbox_attrs,
                      num_anchors):
    """One (batch-tile, spatial-lane-tile) block.

    x_ref / o_ref : (TB, A, bbox_attrs, TS)  raw logits / transformed preds
    add_ref       : (2, TS)                  stride * (x_cell, y_cell) offsets
    """
    del num_anchors  # length of `anchors` is authoritative
    stride_f = jnp.float32(stride)
    attrs = bbox_attrs
    ts = x_ref.shape[-1]

    # Per-attr-row scale / offset planes, built in-kernel from the tiny (2, TS)
    # offsets operand (pure VPU selects — no extra HBM traffic, no dense
    # non-splat constants).
    row = jax.lax.broadcasted_iota(jnp.int32, (attrs, ts), 0)
    scale = jnp.where(row < 2, stride_f, jnp.float32(1.0))          # (attrs, TS)
    off = jnp.where(row == 0, add_ref[0:1, :],
                    jnp.where(row == 1, add_ref[1:2, :],
                              jnp.float32(0.0)))                     # (attrs, TS)

    # One fused full-tile pass -> one unmasked full-width store.
    # rows 0:2 : sigmoid(p) * stride + cell offset
    # rows 4:  : sigmoid(p)            (scale = 1, offset = 0)
    # rows 2:4 : don't-care here, overwritten below.
    o_ref[...] = (jax.nn.sigmoid(x_ref[...].astype(jnp.float32))
                  * scale[None, None] + off[None, None])

    # Small 2-row overwrite per anchor: exp(p) * anchor (anchors are baked-in
    # Python floats -> splat constants; exp restricted to these rows only).
    for ai, (aw, ah) in enumerate(anchors):
        e = jnp.exp(x_ref[:, ai, 2:4, :].astype(jnp.float32))       # (TB, 2, TS)
        arow = jax.lax.broadcasted_iota(jnp.int32, e.shape, 1)
        o_ref[:, ai, 2:4, :] = e * jnp.where(arow == 0,
                                             jnp.float32(aw), jnp.float32(ah))


def _choose_tiling(b, num_anchors, bbox_attrs, s, in_itemsize):
    """VMEM-budgeted (batch-tile, lane-tile) selection.

    Targets ~4 MiB (in + f32 out, single copy) per grid step and keeps >= 2
    parallel grid steps whenever possible so both v7x TensorCores get work.
    """
    lane_groups = pl.cdiv(s, 128)                       # 128-lane cell groups
    bytes_per_group = num_anchors * bbox_attrs * 128 * (in_itemsize + 4)
    budget = 4 * 1024 * 1024
    max_groups = max(1, budget // bytes_per_group)

    if b == 1 and lane_groups >= 2:
        # split spatially so there are >= 2 grid steps even for batch 1 (v7x)
        groups_per_tile = min(max_groups, pl.cdiv(lane_groups, 2))
    else:
        groups_per_tile = min(max_groups, lane_groups)
    ts = groups_per_tile * 128
    n_s_tiles = pl.cdiv(lane_groups, groups_per_tile)

    # Fold batch into the block only when the whole spatial extent fits one
    # tile; pick the largest divisor of b that fits the budget and still
    # leaves >= 2 grid steps.
    tb = 1
    if n_s_tiles == 1 and b > 1:
        max_b = max(1, budget // (bytes_per_group * groups_per_tile))
        for cand in range(min(b, max_b), 0, -1):
            if b % cand == 0 and (b // cand) >= 2:
                tb = cand
                break
    n_b_tiles = pl.cdiv(b, tb)
    return tb, ts, n_s_tiles, n_b_tiles


def detection_layer(x, inp_dim, anchors, num_classes):
    """x: (B, A*(5+num_classes), G, G) NCHW -> (B, G*G*A, 5+num_classes) f32."""
    # TODO(synk): the `confidence` arg of DetectionLayer.forward is unused by
    # predict_transform's math (no thresholding happens there), so it is omitted.
    b, c, g, g2 = x.shape
    assert g == g2
    bbox_attrs = 5 + num_classes
    num_anchors = len(anchors)
    assert c == num_anchors * bbox_attrs
    stride = inp_dim // g
    s = g * g
    in_itemsize = jnp.dtype(x.dtype).itemsize

    tb, ts, n_s_tiles, n_b_tiles = _choose_tiling(
        b, num_anchors, bbox_attrs, s, in_itemsize)

    # Glue: split channels into (anchor, attr) and flatten spatial — a pure
    # reshape, no pad, no extra HBM pass.  Native dtype is kept.
    x_r = x.reshape(b, num_anchors, bbox_attrs, s)

    # Precomputed per-cell offsets, already scaled by stride, sized to the
    # tiled lane extent so every offsets-block read is in-bounds (tiny array).
    s_total = n_s_tiles * ts
    cols = jnp.arange(s_total, dtype=jnp.int32)
    stride_f = jnp.float32(stride)
    add01 = jnp.stack([(cols % g).astype(jnp.float32) * stride_f,
                       (cols // g).astype(jnp.float32) * stride_f], axis=0)

    kernel = functools.partial(
        _detection_kernel,
        stride=stride,
        anchors=[(float(a[0]), float(a[1])) for a in anchors],
        bbox_attrs=bbox_attrs,
        num_anchors=num_anchors)

    elems = b * num_anchors * bbox_attrs * s
    cost = pl.CostEstimate(
        flops=4 * elems,
        transcendentals=elems,
        bytes_accessed=elems * (in_itemsize + 4) + 2 * s_total * 4)

    # Explicit VMEM limit: double-buffered in/out tiles + offsets + slack,
    # capped at v7x's 64 MiB physical VMEM.
    vmem_need = (2 * tb * num_anchors * bbox_attrs * ts * (in_itemsize + 4)
                 + 4 * (2 * ts * 4) + (2 << 20))
    vmem_limit = int(min(64 * 1024 * 1024, max(vmem_need, 4 * 1024 * 1024)))

    out = pl.pallas_call(
        kernel,
        out_shape=jax.ShapeDtypeStruct((b, num_anchors, bbox_attrs, s),
                                       jnp.float32),
        grid_spec=pltpu.PrefetchScalarGridSpec(
            num_scalar_prefetch=0,
            grid=(n_b_tiles, n_s_tiles),
            in_specs=[
                pl.BlockSpec((tb, num_anchors, bbox_attrs, ts),
                             lambda bi, si: (bi, 0, 0, si)),
                pl.BlockSpec((2, ts), lambda bi, si: (0, si)),
            ],
            out_specs=pl.BlockSpec((tb, num_anchors, bbox_attrs, ts),
                                   lambda bi, si: (bi, 0, 0, si)),
        ),
        compiler_params=pltpu.CompilerParams(
            dimension_semantics=("parallel", "parallel"),
            vmem_limit_bytes=vmem_limit),
        cost_estimate=cost,
    )(x_r, add01)

    # TODO(synk): this final permute to the PyTorch predict_transform layout is
    # a second HBM pass; in a full model fuse it into the consumer (cross-scale
    # concat / NMS) or keep the (B, A, attrs, S) layout downstream.
    pred = jnp.transpose(out, (0, 3, 1, 2)).reshape(b, s * num_anchors, bbox_attrs)
    return pred


def _reference(x, inp_dim, anchors, num_classes):
    """Pure-jnp port of predict_transform for verification."""
    b, c, g, _ = x.shape
    bbox_attrs = 5 + num_classes
    na = len(anchors)
    stride = inp_dim // g
    s = g * g
    p = x.astype(jnp.float32).reshape(b, na, bbox_attrs, s)
    p = jnp.transpose(p, (0, 3, 1, 2)).reshape(b, s * na, bbox_attrs)

    xy = jax.nn.sigmoid(p[..., 0:2])
    col = jnp.arange(s) % g
    row = jnp.arange(s) // g
    offs = jnp.stack([col, row], axis=-1).astype(jnp.float32)      # (S, 2)
    offs = jnp.repeat(offs, na, axis=0)[None]                      # (1, S*A, 2)
    xy = xy + offs

    anc = jnp.asarray(anchors, dtype=jnp.float32) / stride         # (A, 2)
    anc = jnp.tile(anc, (s, 1))[None]                              # (1, S*A, 2)
    wh = jnp.exp(p[..., 2:4]) * anc

    obj = jax.nn.sigmoid(p[..., 4:5])
    cls = jax.nn.sigmoid(p[..., 5:])
    box = jnp.concatenate([xy, wh], axis=-1) * stride
    return jnp.concatenate([box, obj, cls], axis=-1)


if __name__ == "__main__":
    # Small, YOLO-consistent shapes.
    B = 2
    num_classes = 11           # bbox_attrs = 16
    anchors = [(10.0, 13.0), (16.0, 30.0), (33.0, 23.0)]
    A = len(anchors)
    G = 16
    inp_dim = 64               # stride = 4
    C = A * (5 + num_classes)  # 48

    key = jax.random.PRNGKey(0)
    x = jax.random.normal(key, (B, C, G, G), dtype=jnp.float32)

    # float32 path (module-faithful)
    pred = detection_layer(x, inp_dim, anchors, num_classes)
    pred = jax.block_until_ready(pred)
    ref = _reference(x, inp_dim, anchors, num_classes)
    assert pred.shape == (B, G * G * A, 5 + num_classes)
    assert jnp.allclose(pred, ref, atol=1e-4, rtol=1e-5)

    # bf16 path (half the HBM read bytes; kernel casts to f32 in-register)
    x_bf16 = x.astype(jnp.bfloat16)
    pred_bf16 = jax.block_until_ready(
        detection_layer(x_bf16, inp_dim, anchors, num_classes))
    ref_bf16 = _reference(x_bf16, inp_dim, anchors, num_classes)
    assert jnp.allclose(pred_bf16, ref_bf16, atol=1e-3, rtol=1e-3)

    print("KERNEL_OK")
</pallas_src>

<mosaic_0001>
module attributes {stable_mosaic.version = 11 : i64} {
  func.func @_detection_kernel(%arg0: i32, %arg1: i32, %arg2: memref<1x3x16x256xf32, #tpu.memory_space<vmem>>, %arg3: memref<2x256xf32, #tpu.memory_space<vmem>>, %arg4: memref<1x3x16x256xf32, #tpu.memory_space<vmem>>) attributes {dimension_semantics = [#tpu.dimension_semantics<parallel>, #tpu.dimension_semantics<parallel>], iteration_bounds = array<i64: 2, 1>, scalar_prefetch = 0 : i64, scratch_operands = 0 : i64, tpu.core_type = #tpu.core_type<tc>, window_params = [{transform_indices = @transform_0, window_bounds = array<i64: 1, 3, 16, 256>}, {transform_indices = @transform_1, window_bounds = array<i64: 2, 256>}, {transform_indices = @transform_2, window_bounds = array<i64: 1, 3, 16, 256>}]} {
    %0 = tpu.iota {dimensions = array<i32: 0>} : vector<16x256xi32>
    %c2_i32 = arith.constant 2 : i32
    %1 = vector.broadcast %c2_i32 : i32 to vector<16x256xi32>
    %2 = arith.cmpi slt, %0, %1 : vector<16x256xi32>
    %cst = arith.constant 4.000000e+00 : f32
    %cst_0 = arith.constant 1.000000e+00 : f32
    %3 = vector.broadcast %cst : f32 to vector<16x256xf32>
    %4 = vector.broadcast %cst_0 : f32 to vector<16x256xf32>
    %5 = arith.select %2, %3, %4 : vector<16x256xi1>, vector<16x256xf32>
    %c0_i32 = arith.constant 0 : i32
    %6 = vector.broadcast %c0_i32 : i32 to vector<16x256xi32>
    %7 = arith.cmpi eq, %0, %6 : vector<16x256xi32>
    %c0 = arith.constant 0 : index
    %c0_1 = arith.constant 0 : index
    %8 = vector.load %arg3[%c0, %c0_1] : memref<2x256xf32, #tpu.memory_space<vmem>>, vector<1x256xf32>
    %c1_i32 = arith.constant 1 : i32
    %9 = vector.broadcast %c1_i32 : i32 to vector<16x256xi32>
    %10 = arith.cmpi eq, %0, %9 : vector<16x256xi32>
    %c1 = arith.constant 1 : index
    %c0_2 = arith.constant 0 : index
    %11 = vector.load %arg3[%c1, %c0_2] : memref<2x256xf32, #tpu.memory_space<vmem>>, vector<1x256xf32>
    %cst_3 = arith.constant 0.000000e+00 : f32
    %12 = vector.shape_cast %11 : vector<1x256xf32> to vector<1x256xf32>
    %13 = vector.broadcast %12 : vector<1x256xf32> to vector<16x256xf32>
    %14 = vector.broadcast %cst_3 : f32 to vector<16x256xf32>
    %15 = arith.select %10, %13, %14 : vector<16x256xi1>, vector<16x256xf32>
    %16 = vector.shape_cast %8 : vector<1x256xf32> to vector<1x256xf32>
    %17 = vector.broadcast %16 : vector<1x256xf32> to vector<16x256xf32>
    %18 = arith.select %7, %17, %15 : vector<16x256xi1>, vector<16x256xf32>
    %c0_4 = arith.constant 0 : index
    %c0_5 = arith.constant 0 : index
    %c0_6 = arith.constant 0 : index
    %c0_7 = arith.constant 0 : index
    %19 = vector.load %arg2[%c0_4, %c0_5, %c0_6, %c0_7] : memref<1x3x16x256xf32, #tpu.memory_space<vmem>>, vector<1x3x16x256xf32>
    %20 = arith.negf %19 : vector<1x3x16x256xf32>
    %21 = math.exp %20 : vector<1x3x16x256xf32>
    %cst_8 = arith.constant 1.000000e+00 : f32
    %22 = vector.broadcast %cst_8 : f32 to vector<1x3x16x256xf32>
    %23 = arith.addf %22, %21 : vector<1x3x16x256xf32>
    %24 = arith.divf %22, %23 : vector<1x3x16x256xf32>
    %25 = vector.shape_cast %5 : vector<16x256xf32> to vector<1x1x16x256xf32>
    %26 = vector.broadcast %25 : vector<1x1x16x256xf32> to vector<1x3x16x256xf32>
    %27 = arith.mulf %24, %26 : vector<1x3x16x256xf32>
    %28 = vector.shape_cast %18 : vector<16x256xf32> to vector<1x1x16x256xf32>
    %29 = vector.broadcast %28 : vector<1x1x16x256xf32> to vector<1x3x16x256xf32>
    %30 = arith.addf %27, %29 : vector<1x3x16x256xf32>
    %c0_9 = arith.constant 0 : index
    %c0_10 = arith.constant 0 : index
    %c0_11 = arith.constant 0 : index
    %c0_12 = arith.constant 0 : index
    %31 = vector.load %arg4[%c0_9, %c0_10, %c0_11, %c0_12] : memref<1x3x16x256xf32, #tpu.memory_space<vmem>>, vector<1x3x16x256xf32>
    tpu.vector_store %arg4[%c0_9, %c0_10, %c0_11, %c0_12], %30 {strides = array<i32>} : memref<1x3x16x256xf32, #tpu.memory_space<vmem>>, vector<1x3x16x256xf32>,
    %c0_13 = arith.constant 0 : index
    %c0_14 = arith.constant 0 : index
    %c2 = arith.constant 2 : index
    %c0_15 = arith.constant 0 : index
    %32 = vector.load %arg2[%c0_13, %c0_14, %c2, %c0_15] : memref<1x3x16x256xf32, #tpu.memory_space<vmem>>, vector<1x1x2x256xf32>
    %33 = vector.shape_cast %32 : vector<1x1x2x256xf32> to vector<1x2x256xf32>
    %34 = math.exp %33 : vector<1x2x256xf32>
    %35 = tpu.iota {dimensions = array<i32: 1>} : vector<1x2x256xi32>
    %c0_i32_16 = arith.constant 0 : i32
    %36 = vector.broadcast %c0_i32_16 : i32 to vector<1x2x256xi32>
    %37 = arith.cmpi eq, %35, %36 : vector<1x2x256xi32>
    %cst_17 = arith.constant 1.000000e+01 : f32
    %cst_18 = arith.constant 1.300000e+01 : f32
    %38 = vector.broadcast %cst_17 : f32 to vector<1x2x256xf32>
    %39 = vector.broadcast %cst_18 : f32 to vector<1x2x256xf32>
    %40 = arith.select %37, %38, %39 : vector<1x2x256xi1>, vector<1x2x256xf32>
    %41 = arith.mulf %34, %40 : vector<1x2x256xf32>
    %c0_19 = arith.constant 0 : index
    %c0_20 = arith.constant 0 : index
    %c2_21 = arith.constant 2 : index
    %c0_22 = arith.constant 0 : index
    %42 = vector.load %arg4[%c0_19, %c0_20, %c2_21, %c0_22] : memref<1x3x16x256xf32, #tpu.memory_space<vmem>>, vector<1x1x2x256xf32>
    %43 = vector.shape_cast %42 : vector<1x1x2x256xf32> to vector<1x2x256xf32>
    %44 = vector.shape_cast %41 : vector<1x2x256xf32> to vector<1x1x2x256xf32>
    tpu.vector_store %arg4[%c0_19, %c0_20, %c2_21, %c0_22], %44 {strides = array<i32>} : memref<1x3x16x256xf32, #tpu.memory_space<vmem>>, vector<1x1x2x256xf32>,
    %c0_23 = arith.constant 0 : index
    %c1_24 = arith.constant 1 : index
    %c2_25 = arith.constant 2 : index
    %c0_26 = arith.constant 0 : index
    %45 = vector.load %arg2[%c0_23, %c1_24, %c2_25, %c0_26] : memref<1x3x16x256xf32, #tpu.memory_space<vmem>>, vector<1x1x2x256xf32>
    %46 = vector.shape_cast %45 : vector<1x1x2x256xf32> to vector<1x2x256xf32>
    %47 = math.exp %46 : vector<1x2x256xf32>
    %48 = tpu.iota {dimensions = array<i32: 1>} : vector<1x2x256xi32>
    %c0_i32_27 = arith.constant 0 : i32
    %49 = vector.broadcast %c0_i32_27 : i32 to vector<1x2x256xi32>
    %50 = arith.cmpi eq, %48, %49 : vector<1x2x256xi32>
    %cst_28 = arith.constant 1.600000e+01 : f32
    %cst_29 = arith.constant 3.000000e+01 : f32
    %51 = vector.broadcast %cst_28 : f32 to vector<1x2x256xf32>
    %52 = vector.broadcast %cst_29 : f32 to vector<1x2x256xf32>
    %53 = arith.select %50, %51, %52 : vector<1x2x256xi1>, vector<1x2x256xf32>
    %54 = arith.mulf %47, %53 : vector<1x2x256xf32>
    %c0_30 = arith.constant 0 : index
    %c1_31 = arith.constant 1 : index
    %c2_32 = arith.constant 2 : index
    %c0_33 = arith.constant 0 : index
    %55 = vector.load %arg4[%c0_30, %c1_31, %c2_32, %c0_33] : memref<1x3x16x256xf32, #tpu.memory_space<vmem>>, vector<1x1x2x256xf32>
    %56 = vector.shape_cast %55 : vector<1x1x2x256xf32> to vector<1x2x256xf32>
    %57 = vector.shape_cast %54 : vector<1x2x256xf32> to vector<1x1x2x256xf32>
    tpu.vector_store %arg4[%c0_30, %c1_31, %c2_32, %c0_33], %57 {strides = array<i32>} : memref<1x3x16x256xf32, #tpu.memory_space<vmem>>, vector<1x1x2x256xf32>,
    %c0_34 = arith.constant 0 : index
    %c2_35 = arith.constant 2 : index
    %c2_36 = arith.constant 2 : index
    %c0_37 = arith.constant 0 : index
    %58 = vector.load %arg2[%c0_34, %c2_35, %c2_36, %c0_37] : memref<1x3x16x256xf32, #tpu.memory_space<vmem>>, vector<1x1x2x256xf32>
    %59 = vector.shape_cast %58 : vector<1x1x2x256xf32> to vector<1x2x256xf32>
    %60 = math.exp %59 : vector<1x2x256xf32>
    %61 = tpu.iota {dimensions = array<i32: 1>} : vector<1x2x256xi32>
    %c0_i32_38 = arith.constant 0 : i32
    %62 = vector.broadcast %c0_i32_38 : i32 to vector<1x2x256xi32>
    %63 = arith.cmpi eq, %61, %62 : vector<1x2x256xi32>
    %cst_39 = arith.constant 3.300000e+01 : f32
    %cst_40 = arith.constant 2.300000e+01 : f32
    %64 = vector.broadcast %cst_39 : f32 to vector<1x2x256xf32>
    %65 = vector.broadcast %cst_40 : f32 to vector<1x2x256xf32>
    %66 = arith.select %63, %64, %65 : vector<1x2x256xi1>, vector<1x2x256xf32>
    %67 = arith.mulf %60, %66 : vector<1x2x256xf32>
    %c0_41 = arith.constant 0 : index
    %c2_42 = arith.constant 2 : index
    %c2_43 = arith.constant 2 : index
    %c0_44 = arith.constant 0 : index
    %68 = vector.load %arg4[%c0_41, %c2_42, %c2_43, %c0_44] : memref<1x3x16x256xf32, #tpu.memory_space<vmem>>, vector<1x1x2x256xf32>
    %69 = vector.shape_cast %68 : vector<1x1x2x256xf32> to vector<1x2x256xf32>
    %70 = vector.shape_cast %67 : vector<1x2x256xf32> to vector<1x1x2x256xf32>
    tpu.vector_store %arg4[%c0_41, %c2_42, %c2_43, %c0_44], %70 {strides = array<i32>} : memref<1x3x16x256xf32, #tpu.memory_space<vmem>>, vector<1x1x2x256xf32>,
    return
  }
  func.func @transform_0(%arg0: i32, %arg1: i32) -> (i32, i32, i32, i32) {
    %c0_i32 = arith.constant 0 : i32
    %c0_i32_0 = arith.constant 0 : i32
    %c0_i32_1 = arith.constant 0 : i32
    return %arg0, %c0_i32, %c0_i32_0, %arg1 : i32, i32, i32, i32
  }
  func.func @transform_1(%arg0: i32, %arg1: i32) -> (i32, i32) {
    %c0_i32 = arith.constant 0 : i32
    %c0_i32_0 = arith.constant 0 : i32
    return %c0_i32, %arg1 : i32, i32
  }
  func.func @transform_2(%arg0: i32, %arg1: i32) -> (i32, i32, i32, i32) {
    %c0_i32 = arith.constant 0 : i32
    %c0_i32_0 = arith.constant 0 : i32
    %c0_i32_1 = arith.constant 0 : i32
    return %arg0, %c0_i32, %c0_i32_0, %arg1 : i32, i32, i32, i32
  }
}

</mosaic_0001>

<llo_original>
// kernel: tpu_custom_call.1
$region0: #{tpu_custom_call.1}
  #allocation0 [shape = 'u32[]', space=smem, size = 0x4, offset = 0x4, fixed_abs, tag = 'smem constant byte address 0x4 - core index']
  #allocation1 [shape = 'u32[144,128]{1,0:T(1,128)}', space=vmem, size = 0x12000, scoped, tag = 'internal scratch']
  %s0 = inlined_call_operand.hbm [shape: f32[2,3,16,256], index: 0, kind: input, shape index: {}]
  %s1 = inlined_call_operand.hbm [shape: f32[2,256], index: 1, kind: input, shape index: {}]
  %s2 = inlined_call_operand.hbm [shape: f32[2,3,16,256], index: 2, kind: output, shape index: {}]
  %s3 = sld [smem:[#allocation0]]
  $region49: #{tpu_custom_call.1} parent=0
    _
  %s5 = ssub.s32 1, %s3
  %s6 = scalar_select 0, %s5, %s3
  $region1: #{tpu_custom_call.1} parent=0
    #allocation2 [shape = 'u8[98304]{0}', space=vmem, size = 0x18000, scoped, tag = 'input window, operand 0']
    #allocation3 [shape = 's32[2]{0}', space=sflag, size = 0x8, scoped, tag = 'scoped memory for tpu_custom_call.1']
    #allocation4 [shape = 's32[2]{0}', space=sflag, size = 0x8, scoped, tag = 'scoped memory for tpu_custom_call.1']
    #allocation5 [shape = 'u8[2048]{0}', space=vmem, size = 0x800, scoped, tag = 'input window, operand 1, single buffered']
    #allocation6 [shape = 's32[1]{0}', space=sflag, size = 0x4, scoped, tag = 'scoped memory for tpu_custom_call.1']
    #allocation7 [shape = 'u8[98304]{0}', space=vmem, size = 0x18000, scoped, tag = 'output window, operand 0']
    %7 = vsyncpa [#allocation3], 0
    %s8 = scalar_lea.sflag [#allocation3], 1
    %9 = vsyncpa %s8, 0
    %10 = vsyncpa [#allocation6], 0
    %11 = vsyncpa [#allocation4], 0
    %s12 = scalar_lea.sflag [#allocation4], 1
    %13 = vsyncpa %s12, 0
    loop: start=0, step=1, limit=4
    $region2: #{tpu_custom_call.1} parent=1 // loop_pre_header
      _
    $region3: #{tpu_custom_call.1} parent=1 // loop_header
      %s15 = sphi 0, %s19
      %p16 = scmp.ge.s32.totalorder %s15, 4
      %s22 = sphi 0, %s34
      %s23 = sphi 0, %s30
      %s24 = sphi 0, %s22
      %s25 = sphi 0, %s23
      %s26 = sphi 0, %s24
      %s27 = sphi 0, %s25
      %s39 = sphi 0, %s41
      %s42 = sphi 0, %s39
      %s43 = sphi 0, %s42
      %s59 = sphi 0, %s43
      %s65 = sphi 0, %s67
      %s68 = sphi 0, %s65
      %s69 = sphi 0, %s68
      %s85 = sphi 0, %s69
      %s93 = sphi 0, %s95
      %s96 = sphi 0, %s93
      %s97 = sphi 0, %s96
      %s113 = sphi 0, %s97
    $region4: #{tpu_custom_call.1} parent=1 // loop_header_branch
      %18 = sbr.rel (%p16) target = $region8
    $region5: #{tpu_custom_call.1} parent=1 // loop_body
      %s20 = ssub.s32 %s15, 1
      %s21 = ssub.s32 %s15, 2
      %s28 = sadd.s32 1, %s23
      %p29 = scmp.ge.s32.totalorder %s28, 1
      %s30 = scalar_select %p29, 0, %s28
      %s31 = sadd.s32 1, %s22
      %s32 = scalar_select %p29, %s31, %s22
      %p33 = scmp.ge.s32.totalorder %s32, 2
      %s34 = scalar_select %p33, 0, %s32
      %s35 = ssub.s32 %s22, %s34
      %s36 = ssub.s32 %s23, %s30
      %s37 = sor.u32 %s35, %s36
      %p38 = scmp.eq.s32.totalorder %s37, 0
      %s40 = sadd.s32 %s39, 1
      %s41 = scalar_select %p38, %s39, %s40
      %p44 = pneg %p38
      %p45 = scmp.eq.s32.totalorder %s15, 1
      %p46 = por %p44, %p45
      %p47 = scmp.ne.s32.totalorder %s39, %s42
      %p48 = scmp.eq.s32.totalorder %s15, 0
      %p49 = por %p47, %p48
      %p50 = scmp.ne.s32.totalorder %s39, %s42
      %p51 = scmp.eq.s32.totalorder %s20, 1
      %p52 = por %p50, %p51
      %p53 = scmp.ne.s32.totalorder %s42, %s43
      %p54 = scmp.eq.s32.totalorder %s20, 0
      %p55 = por %p53, %p54
      %p56 = scmp.ne.s32.totalorder %s42, %s43
      %p57 = scmp.eq.s32.totalorder %s21, 1
      %p58 = por %p56, %p57
      %p60 = scmp.ne.s32.totalorder %s43, %s59
      %p61 = scmp.eq.s32.totalorder %s21, 0
      %p62 = por %p60, %p61
      %s63 = ssub.s32 %s23, %s30
      %p64 = scmp.eq.s32.totalorder %s63, 0
      %s66 = sadd.s32 %s65, 1
      %s67 = scalar_select %p64, %s65, %s66
      %p70 = pneg %p64
      %p71 = scmp.eq.s32.totalorder %s15, 1
      %p72 = por %p70, %p71
      %p73 = scmp.ne.s32.totalorder %s65, %s68
      %p74 = scmp.eq.s32.totalorder %s15, 0
      %p75 = por %p73, %p74
      %p76 = scmp.ne.s32.totalorder %s65, %s68
      %p77 = scmp.eq.s32.totalorder %s20, 1
      %p78 = por %p76, %p77
      %p79 = scmp.ne.s32.totalorder %s68, %s69
      %p80 = scmp.eq.s32.totalorder %s20, 0
      %p81 = por %p79, %p80
      %p82 = scmp.ne.s32.totalorder %s68, %s69
      %p83 = scmp.eq.s32.totalorder %s21, 1
      %p84 = por %p82, %p83
      %p86 = scmp.ne.s32.totalorder %s69, %s85
      %p87 = scmp.eq.s32.totalorder %s21, 0
      %p88 = por %p86, %p87
      %s89 = ssub.s32 %s22, %s34
      %s90 = ssub.s32 %s23, %s30
      %s91 = sor.u32 %s89, %s90
      %p92 = scmp.eq.s32.totalorder %s91, 0
      %s94 = sadd.s32 %s93, 1
      %s95 = scalar_select %p92, %s93, %s94
      %p98 = pneg %p92
      %p99 = scmp.eq.s32.totalorder %s15, 1
      %p100 = por %p98, %p99
      %p101 = scmp.ne.s32.totalorder %s93, %s96
      %p102 = scmp.eq.s32.totalorder %s15, 0
      %p103 = por %p101, %p102
      %p104 = scmp.ne.s32.totalorder %s93, %s96
      %p105 = scmp.eq.s32.totalorder %s20, 1
      %p106 = por %p104, %p105
      %p107 = scmp.ne.s32.totalorder %s96, %s97
      %p108 = scmp.eq.s32.totalorder %s20, 0
      %p109 = por %p107, %p108
      %p110 = scmp.ne.s32.totalorder %s96, %s97
      %p111 = scmp.eq.s32.totalorder %s21, 1
      %p112 = por %p110, %p111
      %p114 = scmp.ne.s32.totalorder %s97, %s113
      %p115 = scmp.eq.s32.totalorder %s21, 0
      %p116 = por %p114, %p115
      %p117 = scmp.le.s32.totalorder 1, %s15
      %p118 = scmp.lt.s32.totalorder %s15, 3
      %p119 = pnand %p117, %p118
      %p120 = pneg %p119
      // Predicated region
      $region9: #{tpu_custom_call.1} parent=5 // pred_check
        _
      $region10: #{tpu_custom_call.1} parent=5 // pred_check_branch
        %122 = sbr.rel (%p119) target = $region12
      $region11: #{tpu_custom_call.1} parent=5 // pred_region
        %s123 = ssub.s32 %s15, 1
        // Predicated region
        $region13: #{tpu_custom_call.1} parent=11 // pred_check
          %p124 = pneg %p81
        $region14: #{tpu_custom_call.1} parent=11 // pred_check_branch
          %126 = sbr.rel (%p124) target = $region16
        $region15: #{tpu_custom_call.1} parent=11 // pred_region
          %s127 = smul.u32 2, %s25
          %s129 = ssub.s32 64, 64
          %130 = vsyncadd [#allocation6], %s129
          %s131 = smul.addr %s127, 32
          %s132 = scalar_lea.hbm %s1, %s131
          %s134 = sshll.u32 [#allocation5], 4
          %s135 = int_to_ptr.vmem [resolvable:$true] %s134
          %137 = dma.hbm_to_vmem [thread:$0]  %s132, 64, %s135, [#allocation6]
        $region16: #{tpu_custom_call.1} parent=11 // pred_fallthru
          _
      $region12: #{tpu_custom_call.1} parent=5 // pred_fallthru
        _
      %p138 = scmp.lt.s32.totalorder %s15, 2
      // Predicated region
      $region17: #{tpu_custom_call.1} parent=5 // pred_check
        %p139 = pneg %p138
      $region18: #{tpu_custom_call.1} parent=5 // pred_check_branch
        %141 = sbr.rel (%p139) target = $region20
      $region19: #{tpu_custom_call.1} parent=5 // pred_region
        // Predicated region
        $region21: #{tpu_custom_call.1} parent=19 // pred_check
          %p142 = pneg %p49
        $region22: #{tpu_custom_call.1} parent=19 // pred_check_branch
          %144 = sbr.rel (%p142) target = $region24
        $region23: #{tpu_custom_call.1} parent=19 // pred_region
          %s145 = sand.u32 %s39, 1
          %s146 = scalar_lea.sflag [#allocation3], %s145
          %s147 = sand.u32 %s39, 1
          %s148 = smul.addr %s147, 96
          %s149 = scalar_lea.vmem [#allocation2], %s148
          %s150 = smul.u32 2, %s23
          %s152 = ssub.s32 1536, 1536
          %153 = vsyncadd %s146, %s152
          %s154 = smul.addr %s22, 12
          %s155 = sadd.s32 %s150, %s154
          %s156 = smul.addr %s155, 128
          %s157 = scalar_lea.hbm %s0, %s156
          %s158 = sshll.u32 %s149, 4
          %s159 = int_to_ptr.vmem [resolvable:$true] %s158
          %164 = dma.hbm_to_vmem [thread:$0]  %s157, 1536, %s159, %s146, 256, 256, 16
        $region24: #{tpu_custom_call.1} parent=19 // pred_fallthru
          _
      $region20: #{tpu_custom_call.1} parent=5 // pred_fallthru
        _
      %p165 = scmp.le.s32.totalorder 1, %s15
      %p166 = scmp.lt.s32.totalorder %s15, 3
      %p167 = pnand %p165, %p166
      %p168 = pneg %p167
      // Predicated region
      $region25: #{tpu_custom_call.1} parent=5 // pred_check
        _
      $region26: #{tpu_custom_call.1} parent=5 // pred_check_branch
        %170 = sbr.rel (%p167) target = $region28
      $region27: #{tpu_custom_call.1} parent=5 // pred_region
        %s171 = ssub.s32 %s15, 1
        %s172 = sand.u32 %s42, 1
        %s173 = scalar_lea.sflag [#allocation3], %s172
        %s174 = sand.u32 %s42, 1
        %s175 = smul.addr %s174, 96
        %s176 = scalar_lea.vmem [#allocation2], %s175
        // Predicated region
        $region29: #{tpu_custom_call.1} parent=27 // pred_check
          %p177 = pneg %p55
        $region30: #{tpu_custom_call.1} parent=27 // pred_check_branch
          %179 = sbr.rel (%p177) target = $region32
        $region31: #{tpu_custom_call.1} parent=27 // pred_region
          %180 = dma.done %s173, 1536
        $region32: #{tpu_custom_call.1} parent=27 // pred_fallthru
          _
        // Predicated region
        $region33: #{tpu_custom_call.1} parent=27 // pred_check
          %p181 = pneg %p81
        $region34: #{tpu_custom_call.1} parent=27 // pred_check_branch
          %183 = sbr.rel (%p181) target = $region36
        $region35: #{tpu_custom_call.1} parent=27 // pred_region
          %184 = dma.done [#allocation6], 64
        $region36: #{tpu_custom_call.1} parent=27 // pred_fallthru
          _
        %s185 = sand.u32 %s42, 1
        %s186 = scalar_lea.sflag [#allocation3], %s185
        %s187 = sand.u32 %s42, 1
        %s188 = smul.addr %s187, 96
        %s189 = scalar_lea.vmem [#allocation2], %s188
        %p190 = pneg %p55
        %p191 = pneg %p52
        %p192 = pneg %p81
        %p193 = pneg %p78
        %p194 = pneg %p109
        %p195 = pneg %p106
        %s196 = sand.u32 %s96, 1
        %s197 = scalar_lea.sflag [#allocation4], %s196
        %s198 = sand.u32 %s96, 1
        %s199 = smul.addr %s198, 96
        %s200 = scalar_lea.vmem [#allocation7], %s199
        %s201 = smul.u32 2, %s25
        %s202 = smul.u32 2, %s25
        %s203 = smul.u32 2, %s25
        %v204 = vlaneseq
        %v205 = vshrl.u32 %v204, 7
        %v206 = vadd.s32 %v205, 8
        %vm207 = vcmp.lt.s32.totalorder %v205, 2
        %vm208 = vcmp.lt.s32.totalorder %v206, 2
        %v209 = vsel %vm207, 4.0, 1.0
        %v210 = vsel %vm208, 4.0, 1.0
        %vm211 = vcmp.eq.s32.totalorder %v205, 0
        %vm212 = vcmp.eq.s32.totalorder %v206, 0
        %v213 = vld [vmem:[#allocation5] ss:$2 sm:$0x3]
        %vm214 = vcmp.eq.s32.totalorder %v205, 1
        %vm215 = vcmp.eq.s32.totalorder %v206, 1
        %s216 = scalar_lea.vmem [#allocation5], 1
        %v217 = vld [vmem:[%s216] ss:$2 sm:$0x3]
        %v219 = vlaneseq
        %v220 = vshrl.u32 %v219, 7
        %v221 = vsub.s32 0, %v220
        %v222 = vrot.slane %v217, %v221
        %v223 = vlaneseq
        %v224 = vshrl.u32 %v223, 7
        %v225 = vsub.s32 1, %v224
        %v226 = vrot.slane %v217, %v225
        %v229 = vsel %vm214, %v222, 0.0
        %v230 = vsel %vm214, %v226, 0.0
        %v231 = vsel %vm215, %v222, 0.0
        %v232 = vsel %vm215, %v226, 0.0
        %v234 = vlaneseq
        %v235 = vshrl.u32 %v234, 7
        %v236 = vsub.s32 0, %v235
        %v237 = vrot.slane %v213, %v236
        %v238 = vlaneseq
        %v239 = vshrl.u32 %v238, 7
        %v240 = vsub.s32 1, %v239
        %v241 = vrot.slane %v213, %v240
        %v244 = vsel %vm211, %v237, %v229
        %v245 = vsel %vm211, %v241, %v230
        %v246 = vsel %vm212, %v237, %v231
        %v247 = vsel %vm212, %v241, %v232
        %v248 = vld [vmem:[%s176] sm:$0xff]
        %v249 = vld [vmem:[%s176 + $0x8] sm:$0xff]
        %v250 = vld [vmem:[%s176 + $0x10] sm:$0xff]
        %v251 = vld [vmem:[%s176 + $0x18] sm:$0xff]
        %v252 = vld [vmem:[%s176 + $0x20] sm:$0xff]
        %v253 = vld [vmem:[%s176 + $0x28] sm:$0xff]
        %v254 = vld [vmem:[%s176 + $0x30] sm:$0xff]
        %v255 = vld [vmem:[%s176 + $0x38] sm:$0xff]
        %v256 = vld [vmem:[%s176 + $0x40] sm:$0xff]
        %v257 = vld [vmem:[%s176 + $0x48] sm:$0xff]
        %v258 = vld [vmem:[%s176 + $0x50] sm:$0xff]
        %v259 = vld [vmem:[%s176 + $0x58] sm:$0xff]
        %v260 = vxor.u32 %v248, 2147483648
        %v261 = vxor.u32 %v249, 2147483648
        %v262 = vxor.u32 %v250, 2147483648
        %v263 = vxor.u32 %v251, 2147483648
        %v264 = vxor.u32 %v252, 2147483648
        %v265 = vxor.u32 %v253, 2147483648
        %v266 = vxor.u32 %v254, 2147483648
        %v267 = vxor.u32 %v255, 2147483648
        %v268 = vxor.u32 %v256, 2147483648
        %v269 = vxor.u32 %v257, 2147483648
        %v270 = vxor.u32 %v258, 2147483648
        %v271 = vxor.u32 %v259, 2147483648
        %v272 = vmul.f32 %v260, 1.442695
        %v273 = vpow.pop %v272
        %v274 = vmul.f32 %v261, 1.442695
        %v275 = vpow.pop %v274
        %v276 = vmul.f32 %v262, 1.442695
        %v277 = vpow.pop %v276
        %v278 = vmul.f32 %v263, 1.442695
        %v279 = vpow.pop %v278
        %v280 = vmul.f32 %v264, 1.442695
        %v281 = vpow.pop %v280
        %v282 = vmul.f32 %v265, 1.442695
        %v283 = vpow.pop %v282
        %v284 = vmul.f32 %v266, 1.442695
        %v285 = vpow.pop %v284
        %v286 = vmul.f32 %v267, 1.442695
        %v287 = vpow.pop %v286
        %v288 = vmul.f32 %v268, 1.442695
        %v289 = vpow.pop %v288
        %v290 = vmul.f32 %v269, 1.442695
        %v291 = vpow.pop %v290
        %v292 = vmul.f32 %v270, 1.442695
        %v293 = vpow.pop %v292
        %v294 = vmul.f32 %v271, 1.442695
        %v295 = vpow.pop %v294
        %v296 = vadd.f32 %v273, 1.0
        %v297 = vadd.f32 %v275, 1.0
        %v298 = vadd.f32 %v277, 1.0
        %v299 = vadd.f32 %v279, 1.0
        %v300 = vadd.f32 %v281, 1.0
        %v301 = vadd.f32 %v283, 1.0
        %v302 = vadd.f32 %v285, 1.0
        %v303 = vadd.f32 %v287, 1.0
        %v304 = vadd.f32 %v289, 1.0
        %v305 = vadd.f32 %v291, 1.0
        %v306 = vadd.f32 %v293, 1.0
        %v307 = vadd.f32 %v295, 1.0
        %v308 = vrcp.pop %v296
        %v309 = vmul.f32 1.0, %v308
        %v310 = vrcp.pop %v297
        %v311 = vmul.f32 1.0, %v310
        %v312 = vrcp.pop %v298
        %v313 = vmul.f32 1.0, %v312
        %v314 = vrcp.pop %v299
        %v315 = vmul.f32 1.0, %v314
        %v316 = vrcp.pop %v300
        %v317 = vmul.f32 1.0, %v316
        %v318 = vrcp.pop %v301
        %v319 = vmul.f32 1.0, %v318
        %v320 = vrcp.pop %v302
        %v321 = vmul.f32 1.0, %v320
        %v322 = vrcp.pop %v303
        %v323 = vmul.f32 1.0, %v322
        %v324 = vrcp.pop %v304
        %v325 = vmul.f32 1.0, %v324
        %v326 = vrcp.pop %v305
        %v327 = vmul.f32 1.0, %v326
        %v328 = vrcp.pop %v306
        %v329 = vmul.f32 1.0, %v328
        %v330 = vrcp.pop %v307
        %v331 = vmul.f32 1.0, %v330
        %v332 = vmul.f32 %v309, %v209
        %v333 = vmul.f32 %v311, %v209
        %v334 = vmul.f32 %v313, %v210
        %v335 = vmul.f32 %v315, %v210
        %v336 = vmul.f32 %v317, %v209
        %v337 = vmul.f32 %v319, %v209
        %v338 = vmul.f32 %v321, %v210
        %v339 = vmul.f32 %v323, %v210
        %v340 = vmul.f32 %v325, %v209
        %v341 = vmul.f32 %v327, %v209
        %v342 = vmul.f32 %v329, %v210
        %v343 = vmul.f32 %v331, %v210
        %v344 = vadd.f32 %v332, %v244
        %v345 = vadd.f32 %v333, %v245
        %v346 = vadd.f32 %v334, %v246
        %v347 = vadd.f32 %v335, %v247
        %v348 = vadd.f32 %v336, %v244
        %v349 = vadd.f32 %v337, %v245
        %v350 = vadd.f32 %v338, %v246
        %v351 = vadd.f32 %v339, %v247
        %v352 = vadd.f32 %v340, %v244
        %v353 = vadd.f32 %v341, %v245
        %v354 = vadd.f32 %v342, %v246
        %v355 = vadd.f32 %v343, %v247
        %356 = vst [vmem:[%s200] sm:$0xff] %v344
        %357 = vst [vmem:[%s200 + $0x8] sm:$0xff] %v345
        %358 = vst [vmem:[%s200 + $0x10] sm:$0xff] %v346
        %359 = vst [vmem:[%s200 + $0x18] sm:$0xff] %v347
        %360 = vst [vmem:[%s200 + $0x20] sm:$0xff] %v348
        %361 = vst [vmem:[%s200 + $0x28] sm:$0xff] %v349
        %362 = vst [vmem:[%s200 + $0x30] sm:$0xff] %v350
        %363 = vst [vmem:[%s200 + $0x38] sm:$0xff] %v351
        %364 = vst [vmem:[%s200 + $0x40] sm:$0xff] %v352
        %365 = vst [vmem:[%s200 + $0x48] sm:$0xff] %v353
        %366 = vst [vmem:[%s200 + $0x50] sm:$0xff] %v354
        %367 = vst [vmem:[%s200 + $0x58] sm:$0xff] %v355
        %v368 = vld [vmem:[%s176] sm:$0xc]
        %v369 = vld [vmem:[%s176 + $0x8] sm:$0xc]
        %v370 = vmul.f32 %v368, 1.442695
        %v371 = vpow.pop %v370
        %v372 = vmul.f32 %v369, 1.442695
        %v373 = vpow.pop %v372
        %v374 = vsel %vm211, 10.0, 13.0
        %v376 = vrot.slane %v374, 6
        %v378 = vmul.f32 %v371, %v376
        %v379 = vmul.f32 %v373, %v376
        %380 = vst [vmem:[%s200] sm:$0xc] %v378
        %381 = vst [vmem:[%s200 + $0x8] sm:$0xc] %v379
        %s382 = scalar_lea.vmem %s176, 32 [#allocation2]
        %v383 = vld [vmem:[%s382] sm:$0xc]
        %v384 = vld [vmem:[%s382 + $0x8] sm:$0xc]
        %v385 = vmul.f32 %v383, 1.442695
        %v386 = vpow.pop %v385
        %v387 = vmul.f32 %v384, 1.442695
        %v388 = vpow.pop %v387
        %v389 = vsel %vm211, 16.0, 30.0
        %v391 = vrot.slane %v389, 6
        %v393 = vmul.f32 %v386, %v391
        %v394 = vmul.f32 %v388, %v391
        %s395 = scalar_lea.vmem %s200, 32 [#allocation7]
        %396 = vst [vmem:[%s395] sm:$0xc] %v393
        %397 = vst [vmem:[%s395 + $0x8] sm:$0xc] %v394
        %s398 = scalar_lea.vmem %s176, 64 [#allocation2]
        %v399 = vld [vmem:[%s398] sm:$0xc]
        %v400 = vld [vmem:[%s398 + $0x8] sm:$0xc]
        %v401 = vmul.f32 %v399, 1.442695
        %v402 = vpow.pop %v401
        %v403 = vmul.f32 %v400, 1.442695
        %v404 = vpow.pop %v403
        %v405 = vsel %vm211, 33.0, 23.0
        %v407 = vrot.slane %v405, 6
        %v409 = vmul.f32 %v402, %v407
        %v410 = vmul.f32 %v404, %v407
        %s411 = scalar_lea.vmem %s200, 64 [#allocation7]
        %412 = vst [vmem:[%s411] sm:$0xc] %v409
        %413 = vst [vmem:[%s411 + $0x8] sm:$0xc] %v410
        %s414 = sand.u32 %s96, 1
        %s415 = scalar_lea.sflag [#allocation4], %s414
        %s416 = sand.u32 %s96, 1
        %s417 = smul.addr %s416, 96
        %s418 = scalar_lea.vmem [#allocation7], %s417
        // Predicated region
        $region37: #{tpu_custom_call.1} parent=27 // pred_check
          %p419 = pneg %p106
        $region38: #{tpu_custom_call.1} parent=27 // pred_check_branch
          %421 = sbr.rel (%p419) target = $region40
        $region39: #{tpu_custom_call.1} parent=27 // pred_region
          %s422 = smul.u32 2, %s25
          %s424 = ssub.s32 1536, 1536
          %425 = vsyncadd %s415, %s424
          %s426 = smul.addr %s24, 12
          %s427 = sadd.s32 %s422, %s426
          %s428 = smul.addr %s427, 128
          %s429 = scalar_lea.hbm %s2, %s428
          %s430 = sshll.u32 %s418, 4
          %s431 = int_to_ptr.vmem [resolvable:$true] %s430
          %436 = dma.vmem_to_hbm [thread:$0]  %s431, 1536, %s429, %s415, 256, 256, 16
        $region40: #{tpu_custom_call.1} parent=27 // pred_fallthru
          _
      $region28: #{tpu_custom_call.1} parent=5 // pred_fallthru
        _
      %p437 = scmp.le.s32.totalorder 2, %s15
      // Predicated region
      $region41: #{tpu_custom_call.1} parent=5 // pred_check
        %p438 = pneg %p437
      $region42: #{tpu_custom_call.1} parent=5 // pred_check_branch
        %440 = sbr.rel (%p438) target = $region44
      $region43: #{tpu_custom_call.1} parent=5 // pred_region
        %s441 = ssub.s32 %s15, 2
        // Predicated region
        $region45: #{tpu_custom_call.1} parent=43 // pred_check
          %p442 = pneg %p112
        $region46: #{tpu_custom_call.1} parent=43 // pred_check_branch
          %444 = sbr.rel (%p442) target = $region48
        $region47: #{tpu_custom_call.1} parent=43 // pred_region
          %s445 = sand.u32 %s97, 1
          %s446 = scalar_lea.sflag [#allocation4], %s445
          %s447 = sand.u32 %s97, 1
          %s448 = smul.addr %s447, 96
          %s449 = scalar_lea.vmem [#allocation7], %s448
          %450 = dma.done %s446, 1536
        $region48: #{tpu_custom_call.1} parent=43 // pred_fallthru
          _
      $region44: #{tpu_custom_call.1} parent=5 // pred_fallthru
        _
    $region6: #{tpu_custom_call.1} parent=1 // loop_footer
      %s19 = sadd.s32 1, %s15
    $region7: #{tpu_custom_call.1} parent=1 // loop_footer_branch
      %14 = sbr.rel target = $region3
    $region8: #{tpu_custom_call.1} parent=1 // loop_exit
      _
    %451 = vsyncpa [#allocation3], 1
    %s452 = scalar_lea.sflag [#allocation3], 1
    %453 = vsyncpa %s452, 1
    %454 = vsyncpa [#allocation6], 1
    %455 = vsyncpa [#allocation4], 1
    %s456 = scalar_lea.sflag [#allocation4], 1
    %457 = vsyncpa %s456, 1

</llo_original>
